<compile_context>
chip_gen: v7x
topology: tpu7x:2x2x1
jax: 0.10.0
libtpu: 0.0.40
codegen_flags: <defaults>
</compile_context>

<pallas_src>
import math

import jax
import jax.numpy as jnp
from jax.experimental import pallas as pl
from jax.experimental.pallas import tpu as pltpu


def _make_mean_kernel(C: int, c_chunk: int):
    """Build a kernel reducing a [Bt, C, T] block to its [Bt, 1, T] channel mean."""
    inv_c = 1.0 / C  # Python float -> inlined literal, NOT a captured jnp constant

    if C <= 16:
        # Small channel count: single streamed sum over the non-minor channel axis.
        def kernel(x_ref, o_ref):
            x = x_ref[...].astype(jnp.float32)
            o_ref[...] = (jnp.sum(x, axis=1, keepdims=True) * inv_c).astype(o_ref.dtype)

        return kernel

    # Larger channel count: chunked accumulation so the live f32 chunk stays
    # small (<= ~16 vregs per output vreg) and never forces spill stores.
    n_full = C // c_chunk
    rem = C % c_chunk

    def kernel(x_ref, o_ref):
        bt, _, t = x_ref.shape
        acc = jnp.zeros((bt, 1, t), jnp.float32)

        def body(i, acc):
            start = pl.multiple_of(i * c_chunk, c_chunk)
            chunk = x_ref[:, pl.ds(start, c_chunk), :].astype(jnp.float32)
            return acc + jnp.sum(chunk, axis=1, keepdims=True)

        if n_full:
            acc = jax.lax.fori_loop(0, n_full, body, acc, unroll=min(4, n_full))
        if rem:
            tail = x_ref[:, pl.ds(n_full * c_chunk, rem), :].astype(jnp.float32)
            acc = acc + jnp.sum(tail, axis=1, keepdims=True)
        o_ref[...] = (acc * inv_c).astype(o_ref.dtype)

    return kernel


def _choose_tiles(B: int, C: int, hw: int, itemsize: int):
    """Pick (batch tile, spatial tile) giving ~2 MiB lane-dense input blocks."""
    target_block_bytes = 2 << 20   # measured 0.25-4 MiB blocks hit 63-86% of HBM roofline
    min_block_bytes = 256 << 10    # don't shrink below this when adding grid steps

    # Spatial tile: lane-dense multiple of 128, or full extent when hw < 128
    # (full-extent last dim also satisfies the (.,128) block rule).
    if hw <= 128:
        t_hw = hw
    else:
        lanes = max(128, (target_block_bytes // max(1, C * itemsize)) // 128 * 128)
        t_hw = min(lanes, pl.cdiv(hw, 128) * 128)

    # Batch tile: fold batch elements when a single-row block is still small.
    row_bytes = C * t_hw * itemsize
    bt = 1
    if row_bytes < target_block_bytes:
        bt = int(min(B, max(1, target_block_bytes // max(1, row_bytes))))

    # v7x has 2 TensorCores sharing the parallel grid: expose enough grid steps
    # for big problems, but never shrink blocks into the overhead-dominated zone.
    def n_steps(bt_, th_):
        return pl.cdiv(B, bt_) * pl.cdiv(hw, th_)

    while n_steps(bt, t_hw) < 8:
        cur_bytes = bt * C * t_hw * itemsize
        if cur_bytes < 2 * min_block_bytes:
            break  # small problem: bigger blocks beat extra (idle) grid steps
        if bt > 1:
            bt = pl.cdiv(bt, 2)
        elif t_hw > 128:
            t_hw = max(128, (pl.cdiv(t_hw, 2) // 128) * 128)
        else:
            break
    return bt, t_hw


def mean_map(x: jax.Array) -> jax.Array:
    """Mean over the channel axis (dim 1) of a [B, C, *spatial] tensor."""
    assert x.ndim >= 3, "input must have at least three dims"
    B, C = x.shape[0], x.shape[1]
    spatial = x.shape[2:]
    hw = math.prod(spatial)

    # Lane-dense layout: flatten spatial dims into one trailing axis (free reshape).
    x2 = x.reshape(B, C, hw)

    itemsize = x.dtype.itemsize
    bt, t_hw = _choose_tiles(B, C, hw, itemsize)
    grid = (pl.cdiv(B, bt), pl.cdiv(hw, t_hw))

    # Chunk of channel rows kept live per accumulation step (8 f32 / 16 bf16 rows).
    c_chunk = max(8, 32 // itemsize)

    out = pl.pallas_call(
        _make_mean_kernel(C, c_chunk),
        out_shape=jax.ShapeDtypeStruct((B, 1, hw), x.dtype),
        grid_spec=pltpu.PrefetchScalarGridSpec(
            num_scalar_prefetch=0,
            grid=grid,
            in_specs=[
                # (batch tile, full channel extent, spatial tile); partial last
                # blocks (batch or spatial) are masked by Pallas on store.
                pl.BlockSpec((bt, C, t_hw), lambda b, s: (b, 0, s)),
            ],
            out_specs=pl.BlockSpec((bt, 1, t_hw), lambda b, s: (b, 0, s)),
        ),
        compiler_params=pltpu.CompilerParams(
            dimension_semantics=("parallel", "parallel"),
            vmem_limit_bytes=32 << 20,
        ),
    )(x2)

    return out.reshape((B,) + spatial)


if __name__ == "__main__":
    key = jax.random.PRNGKey(0)

    # Test 1: the module's canonical small shape (fast path, C <= 16).
    B, C, H, W = 2, 4, 16, 16
    x = jax.nn.relu(jax.random.normal(key, (B, C, H, W), dtype=jnp.float32))
    y = mean_map(x)
    jax.block_until_ready(y)
    y_ref = jnp.mean(x, axis=1)
    assert y.shape == (B, H, W)
    assert jnp.allclose(y, y_ref, atol=1e-5, rtol=1e-5)

    # Test 2: chunked channel path + partial (masked) spatial block + odd batch.
    key2 = jax.random.PRNGKey(1)
    B2, C2, H2, W2 = 3, 40, 9, 20
    x2 = jax.random.normal(key2, (B2, C2, H2, W2), dtype=jnp.float32)
    y2 = mean_map(x2)
    jax.block_until_ready(y2)
    y2_ref = jnp.mean(x2, axis=1)
    assert y2.shape == (B2, H2, W2)
    assert jnp.allclose(y2, y2_ref, atol=1e-5, rtol=1e-5)

    print("KERNEL_OK")
</pallas_src>

<mosaic_0001>
module attributes {stable_mosaic.version = 11 : i64} {
  func.func @kernel(%arg0: i32, %arg1: i32, %arg2: memref<2x4x256xf32, #tpu.memory_space<vmem>>, %arg3: memref<2x1x256xf32, #tpu.memory_space<vmem>>) attributes {dimension_semantics = [#tpu.dimension_semantics<parallel>, #tpu.dimension_semantics<parallel>], iteration_bounds = array<i64: 1, 1>, scalar_prefetch = 0 : i64, scratch_operands = 0 : i64, tpu.core_type = #tpu.core_type<tc>, window_params = [{transform_indices = @transform_0, window_bounds = array<i64: 2, 4, 256>}, {transform_indices = @transform_1, window_bounds = array<i64: 2, 1, 256>}]} {
    %c0 = arith.constant 0 : index
    %c0_0 = arith.constant 0 : index
    %c0_1 = arith.constant 0 : index
    %0 = vector.load %arg2[%c0, %c0_0, %c0_1] : memref<2x4x256xf32, #tpu.memory_space<vmem>>, vector<2x4x256xf32>
    %cst = arith.constant dense<0.000000e+00> : vector<2x256xf32>
    %1 = vector.multi_reduction <add>, %0, %cst [1] : vector<2x4x256xf32> to vector<2x256xf32>
    %2 = vector.shape_cast %1 : vector<2x256xf32> to vector<2x1x256xf32>
    %cst_2 = arith.constant 2.500000e-01 : f32
    %3 = vector.broadcast %cst_2 : f32 to vector<2x1x256xf32>
    %4 = arith.mulf %2, %3 : vector<2x1x256xf32>
    %c0_3 = arith.constant 0 : index
    %c0_4 = arith.constant 0 : index
    %c0_5 = arith.constant 0 : index
    %5 = vector.load %arg3[%c0_3, %c0_4, %c0_5] : memref<2x1x256xf32, #tpu.memory_space<vmem>>, vector<2x1x256xf32>
    tpu.vector_store %arg3[%c0_3, %c0_4, %c0_5], %4 {strides = array<i32>} : memref<2x1x256xf32, #tpu.memory_space<vmem>>, vector<2x1x256xf32>,
    return
  }
  func.func @transform_0(%arg0: i32, %arg1: i32) -> (i32, i32, i32) {
    %c0_i32 = arith.constant 0 : i32
    %c0_i32_0 = arith.constant 0 : i32
    return %arg0, %c0_i32, %arg1 : i32, i32, i32
  }
  func.func @transform_1(%arg0: i32, %arg1: i32) -> (i32, i32, i32) {
    %c0_i32 = arith.constant 0 : i32
    %c0_i32_0 = arith.constant 0 : i32
    return %arg0, %c0_i32, %arg1 : i32, i32, i32
  }
}

</mosaic_0001>

<llo_original>
// kernel: tpu_custom_call.1
$region0: #{tpu_custom_call.1}
  #allocation0 [shape = 'u32[]', space=smem, size = 0x4, offset = 0x4, fixed_abs, tag = 'smem constant byte address 0x4 - core index']
  #allocation1 [shape = 'u32[144,128]{1,0:T(1,128)}', space=vmem, size = 0x12000, scoped, tag = 'internal scratch']
  %s0 = inlined_call_operand.hbm [shape: f32[2,4,256], index: 0, kind: input, shape index: {}]
  %s1 = inlined_call_operand.hbm [shape: f32[2,1,256], index: 1, kind: output, shape index: {}]
  %s2 = sld [smem:[#allocation0]]
  $region18: #{tpu_custom_call.1} parent=0
    _
  %s4 = ssub.s32 1, %s2
  %s5 = scalar_select 0, %s4, %s2
  $region1: #{tpu_custom_call.1} parent=0
    #allocation2 [shape = 'u8[8192]{0}', space=vmem, size = 0x2000, scoped, tag = 'input window, operand 0, single buffered']
    #allocation3 [shape = 's32[1]{0}', space=sflag, size = 0x4, scoped, tag = 'scoped memory for tpu_custom_call.1']
    #allocation4 [shape = 's32[1]{0}', space=sflag, size = 0x4, scoped, tag = 'scoped memory for tpu_custom_call.1']
    #allocation5 [shape = 'u8[2048]{0}', space=vmem, size = 0x800, scoped, tag = 'output window, operand 0, single buffered']
    %6 = vsyncpa [#allocation3], 0
    %7 = vsyncpa [#allocation4], 0
    // Predicated region
    $region2: #{tpu_custom_call.1} parent=1 // pred_check
      _
    $region3: #{tpu_custom_call.1} parent=1 // pred_check_branch
      %9 = sbr.rel (0) target = $region5
    $region4: #{tpu_custom_call.1} parent=1 // pred_region
      %s11 = ssub.s32 256, 256
      %12 = vsyncadd [#allocation3], %s11
      %s13 = sshll.u32 [#allocation2], 4
      %s14 = int_to_ptr.vmem [resolvable:$true] %s13
      %19 = dma.hbm_to_vmem [thread:$0]  %s0, 256, %s14, [#allocation3], 128, 128, 8
    $region5: #{tpu_custom_call.1} parent=1 // pred_fallthru
      _
    // Predicated region
    $region6: #{tpu_custom_call.1} parent=1 // pred_check
      _
    $region7: #{tpu_custom_call.1} parent=1 // pred_check_branch
      %21 = sbr.rel (0) target = $region9
    $region8: #{tpu_custom_call.1} parent=1 // pred_region
      %22 = dma.done [#allocation3], 256
    $region9: #{tpu_custom_call.1} parent=1 // pred_fallthru
      _
    %v23 = vld [vmem:[#allocation2] sm:$0xff]
    %v24 = vld [vmem:[#allocation2 + $0x8] sm:$0xff]
    %v27 = vcombine.high %v23, %v23
    %v28 = vcombine.high %v24, %v24
    %vm31 = vcmask 1043456
    %v32 = vsel %vm31, %v23, 0.0
    %v33 = vrot.slane %v32, 4
    %v34 = vadd.f32 %v32, %v33
    %v35 = vrot.slane %v34, 2
    %v36 = vadd.f32 %v34, %v35
    %v37 = vrot.slane %v36, 1
    %v38 = vadd.f32 %v36, %v37
    %v39 = vsel %vm31, %v27, 0.0
    %v40 = vrot.slane %v39, 4
    %v41 = vadd.f32 %v39, %v40
    %v42 = vrot.slane %v41, 2
    %v43 = vadd.f32 %v41, %v42
    %v44 = vrot.slane %v43, 1
    %v45 = vadd.f32 %v43, %v44
    %v46 = vsel %vm31, %v24, 0.0
    %v47 = vrot.slane %v46, 4
    %v48 = vadd.f32 %v46, %v47
    %v49 = vrot.slane %v48, 2
    %v50 = vadd.f32 %v48, %v49
    %v51 = vrot.slane %v50, 1
    %v52 = vadd.f32 %v50, %v51
    %v53 = vsel %vm31, %v28, 0.0
    %v54 = vrot.slane %v53, 4
    %v55 = vadd.f32 %v53, %v54
    %v56 = vrot.slane %v55, 2
    %v57 = vadd.f32 %v55, %v56
    %v58 = vrot.slane %v57, 1
    %v59 = vadd.f32 %v57, %v58
    %v60 = vmul.f32 %v38, 0.25
    %v61 = vmul.f32 %v45, 0.25
    %v62 = vmul.f32 %v52, 0.25
    %v63 = vmul.f32 %v59, 0.25
    %v68 = vcombine.low %v60, %v61
    %v70 = vunpack.c.l.s4 1966171168
    %v71 = vunpack.c.0.s8 %v70
    %v72 = vlaneseq
    %v73 = vshrl.u32 %v72, 7
    %v74 = vsub.s32 %v71, %v73
    %v75 = vrot.slane %v68, %v74
    %v77 = vunpack.c.l.s4 1966171168
    %v78 = vunpack.c.0.s8 %v77
    %v79 = vlaneseq
    %v80 = vshrl.u32 %v79, 7
    %v81 = vsub.s32 %v78, %v80
    %v82 = vrot.slane %v75, %v81
    %v83 = vcombine.low %v62, %v63
    %v85 = vunpack.c.l.s4 1966171168
    %v86 = vunpack.c.0.s8 %v85
    %v87 = vlaneseq
    %v88 = vshrl.u32 %v87, 7
    %v89 = vsub.s32 %v86, %v88
    %v90 = vrot.slane %v83, %v89
    %v92 = vunpack.c.l.s4 1966171168
    %v93 = vunpack.c.0.s8 %v92
    %v94 = vlaneseq
    %v95 = vshrl.u32 %v94, 7
    %v96 = vsub.s32 %v93, %v95
    %v97 = vrot.slane %v90, %v96
    %v100 = vlaneseq
    %vm101 = vcmp.ge.s32.totalorder %v100, 0
    %vm102 = vcmp.lt.s32.totalorder %v100, 256
    %vm103 = vmand %vm101, %vm102
    %104 = vst.msk [vmem:[#allocation5] sm:$0x3] %vm103, %v82
    %105 = vst.msk [vmem:[#allocation5 + $0x2] sm:$0x3] %vm103, %v97
    // Predicated region
    $region10: #{tpu_custom_call.1} parent=1 // pred_check
      _
    $region11: #{tpu_custom_call.1} parent=1 // pred_check_branch
      %107 = sbr.rel (0) target = $region13
    $region12: #{tpu_custom_call.1} parent=1 // pred_region
      %s109 = ssub.s32 64, 64
      %110 = vsyncadd [#allocation4], %s109
      %s111 = sshll.u32 [#allocation5], 4
      %s112 = int_to_ptr.vmem [resolvable:$true] %s111
      %117 = dma.vmem_to_hbm [thread:$0]  %s112, 64, %s1, [#allocation4], 32, 32, 2
    $region13: #{tpu_custom_call.1} parent=1 // pred_fallthru
      _
    // Predicated region
    $region14: #{tpu_custom_call.1} parent=1 // pred_check
      _
    $region15: #{tpu_custom_call.1} parent=1 // pred_check_branch
      %119 = sbr.rel (0) target = $region17
    $region16: #{tpu_custom_call.1} parent=1 // pred_region
      %120 = dma.done [#allocation4], 64
    $region17: #{tpu_custom_call.1} parent=1 // pred_fallthru
      _
    %121 = vsyncpa [#allocation3], 1
    %122 = vsyncpa [#allocation4], 1

</llo_original>
